<compile_context>
chip_gen: v7x
topology: tpu7x:2x2x1
jax: 0.10.0
libtpu: 0.0.40
codegen_flags: <defaults>
</compile_context>

<pallas_src>
import math

import jax
import jax.numpy as jnp
import numpy as np
from jax.experimental import pallas as pl

# ---- synthetic model dims (small, BERT-like) --------------------------------
VOCAB = 64
H = 32            # hidden size ("size" in the PyTorch module)
FF = 4 * H        # FFN inner dim
T = 8             # sequence length
B = 2             # batch
BT = B * T
N_PUNC = 5
N_CASE = 4
N_HEAD_PAD = 128  # lane-dense padded output width for the two packed heads


def _gelu_exact(x):
    # F.gelu default (erf form): 0.5 * x * (1 + erf(x / sqrt(2)))
    return 0.5 * x * (1.0 + jax.lax.erf(x * jnp.float32(1.0 / math.sqrt(2.0))))


def _layernorm(x, gamma, beta, eps=1e-12):
    mu = jnp.mean(x, axis=-1, keepdims=True)
    var = jnp.mean((x - mu) ** 2, axis=-1, keepdims=True)
    return (x - mu) * jax.lax.rsqrt(var + eps) * gamma + beta


# ---- single fused kernel: embedding + encoder layer + gelu + heads -----------
def fused_kernel(ids_ref, emb_ref, wqkv_ref, bqkv_ref, wo_ref, bo_ref,
                 g1_ref, be1_ref, w1_ref, c1_ref, w2_ref, c2_ref,
                 g2_ref, be2_ref, wh_ref, bh_ref, out_ref):
    # embedding lookup as one-hot matmul (no gather, table resident in VMEM)
    ids = ids_ref[...]                                              # [BT, 1] int32
    iota = jax.lax.broadcasted_iota(jnp.int32, (BT, VOCAB), 1)
    onehot = (ids == iota).astype(jnp.float32)                      # [BT, VOCAB]
    x = jnp.dot(onehot, emb_ref[...], preferred_element_type=jnp.float32)  # [BT, H]

    # fused QKV projection: one MXU push, slice q/k/v from the packed result
    qkv = jnp.dot(x, wqkv_ref[...], preferred_element_type=jnp.float32) + bqkv_ref[...]
    qkv = qkv.reshape(B, T, 3 * H)
    q = qkv[:, :, 0 * H:1 * H]
    k = qkv[:, :, 1 * H:2 * H]
    v = qkv[:, :, 2 * H:3 * H]

    # batched attention (softmax per batch row)
    s = jnp.einsum('bqd,bkd->bqk', q, k, preferred_element_type=jnp.float32)
    s = s * jnp.float32(1.0 / math.sqrt(H))
    s = s - jnp.max(s, axis=-1, keepdims=True)
    p = jnp.exp(s)
    p = p / jnp.sum(p, axis=-1, keepdims=True)
    ctx = jnp.einsum('bqk,bkd->bqd', p, v, preferred_element_type=jnp.float32)
    ctx = ctx.reshape(BT, H)

    attn = jnp.dot(ctx, wo_ref[...], preferred_element_type=jnp.float32) + bo_ref[...]
    h1 = _layernorm(x + attn, g1_ref[...], be1_ref[...])

    # FFN
    f = _gelu_exact(jnp.dot(h1, w1_ref[...], preferred_element_type=jnp.float32) + c1_ref[...])
    f2 = jnp.dot(f, w2_ref[...], preferred_element_type=jnp.float32) + c2_ref[...]
    h2 = _layernorm(h1 + f2, g2_ref[...], be2_ref[...])

    # heads: gelu + dropout(eval identity) + packed, lane-dense (padded to 128) linear
    # TODO(synk): nn.Dropout(0.3) is identity in eval mode; training-mode RNG mask not implemented.
    reps = _gelu_exact(h2)
    out_ref[...] = (jnp.dot(reps, wh_ref[...], preferred_element_type=jnp.float32)
                    + bh_ref[...])


# ---- wrapper ------------------------------------------------------------------
def pack_params(p):
    wqkv = jnp.concatenate([p["wq"], p["wk"], p["wv"]], axis=1)   # [H, 3H]
    bqkv = jnp.concatenate([p["bq"], p["bk"], p["bv"]], axis=1)   # [1, 3H]
    wh = jnp.zeros((H, N_HEAD_PAD), jnp.float32)
    wh = wh.at[:, :N_PUNC].set(p["wp"]).at[:, N_PUNC:N_PUNC + N_CASE].set(p["wc"])
    bh = jnp.zeros((1, N_HEAD_PAD), jnp.float32)
    bh = bh.at[:, :N_PUNC].set(p["bp"]).at[:, N_PUNC:N_PUNC + N_CASE].set(p["bc"])
    return (p["emb_table"], wqkv, bqkv, p["wo"], p["bo"], p["g1"], p["be1"],
            p["w1"], p["c1"], p["w2"], p["c2"], p["g2"], p["be2"], wh, bh)


def model_forward(x_ids, params):
    packed = pack_params(params)
    ids2d = x_ids.reshape(BT, 1).astype(jnp.int32)

    full = lambda shape: pl.BlockSpec(shape, lambda: (0,) * len(shape))
    in_specs = [full(ids2d.shape)] + [full(w.shape) for w in packed]

    out = pl.pallas_call(
        fused_kernel,
        out_shape=jax.ShapeDtypeStruct((BT, N_HEAD_PAD), jnp.float32),
        grid=(),
        in_specs=in_specs,
        out_specs=full((BT, N_HEAD_PAD)),
    )(ids2d, *packed)

    punc = out[:, :N_PUNC].reshape(B, T, N_PUNC)
    case_out = out[:, N_PUNC:N_PUNC + N_CASE].reshape(B, T, N_CASE)
    return punc, case_out


# ---- parameter init (deterministic, synthetic) -------------------------------
def init_params(key):
    ks = jax.random.split(key, 16)
    s = 0.05
    return {
        "emb_table": jax.random.normal(ks[0], (VOCAB, H), jnp.float32) * s,
        "wq": jax.random.normal(ks[1], (H, H), jnp.float32) * s,
        "bq": jnp.zeros((1, H), jnp.float32),
        "wk": jax.random.normal(ks[2], (H, H), jnp.float32) * s,
        "bk": jnp.zeros((1, H), jnp.float32),
        "wv": jax.random.normal(ks[3], (H, H), jnp.float32) * s,
        "bv": jnp.zeros((1, H), jnp.float32),
        "wo": jax.random.normal(ks[4], (H, H), jnp.float32) * s,
        "bo": jnp.zeros((1, H), jnp.float32),
        "g1": jnp.ones((1, H), jnp.float32),
        "be1": jnp.zeros((1, H), jnp.float32),
        "w1": jax.random.normal(ks[5], (H, FF), jnp.float32) * s,
        "c1": jnp.zeros((1, FF), jnp.float32),
        "w2": jax.random.normal(ks[6], (FF, H), jnp.float32) * s,
        "c2": jnp.zeros((1, H), jnp.float32),
        "g2": jnp.ones((1, H), jnp.float32),
        "be2": jnp.zeros((1, H), jnp.float32),
        # heads (PyTorch Linear weight [out,in] -> stored transposed [in,out])
        "wp": jax.random.normal(ks[7], (H, N_PUNC), jnp.float32) * s,
        "bp": jax.random.normal(ks[8], (1, N_PUNC), jnp.float32) * s,
        "wc": jax.random.normal(ks[9], (H, N_CASE), jnp.float32) * s,
        "bc": jax.random.normal(ks[10], (1, N_CASE), jnp.float32) * s,
    }


# ---- pure-JAX reference for verification -------------------------------------
def reference_forward(x_ids, p):
    emb = jnp.take(p["emb_table"], x_ids, axis=0)  # [B,T,H]

    def one(xb):
        q = xb @ p["wq"] + p["bq"]
        k = xb @ p["wk"] + p["bk"]
        v = xb @ p["wv"] + p["bv"]
        s = (q @ k.T) / math.sqrt(H)
        a = jax.nn.softmax(s, axis=-1)
        attn = (a @ v) @ p["wo"] + p["bo"]
        h1 = _layernorm(xb + attn, p["g1"], p["be1"])
        f = _gelu_exact(h1 @ p["w1"] + p["c1"])
        h2 = _layernorm(h1 + f @ p["w2"] + p["c2"], p["g2"], p["be2"])
        return h2

    hidden = jax.vmap(one)(emb)
    reps = _gelu_exact(hidden)  # dropout identity (eval)
    punc = reps @ p["wp"] + p["bp"]
    case_out = reps @ p["wc"] + p["bc"]
    return punc, case_out


if __name__ == "__main__":
    key = jax.random.PRNGKey(0)
    pkey, xkey = jax.random.split(key)
    params = init_params(pkey)
    x_ids = jax.random.randint(xkey, (B, T), 0, VOCAB, dtype=jnp.int32)

    punc, case_out = model_forward(x_ids, params)
    jax.block_until_ready((punc, case_out))

    punc_ref, case_ref = reference_forward(x_ids, params)
    assert punc.shape == (B, T, N_PUNC) and case_out.shape == (B, T, N_CASE)
    np.testing.assert_allclose(np.asarray(punc), np.asarray(punc_ref), rtol=1e-4, atol=1e-4)
    np.testing.assert_allclose(np.asarray(case_out), np.asarray(case_ref), rtol=1e-4, atol=1e-4)
    print("KERNEL_OK")
</pallas_src>

<mosaic_0001>
module attributes {stable_mosaic.version = 11 : i64} {
  func.func @fused_kernel(%arg0: memref<16x1xi32, #tpu.memory_space<vmem>>, %arg1: memref<64x32xf32, #tpu.memory_space<vmem>>, %arg2: memref<32x96xf32, #tpu.memory_space<vmem>>, %arg3: memref<1x96xf32, #tpu.memory_space<vmem>>, %arg4: memref<32x32xf32, #tpu.memory_space<vmem>>, %arg5: memref<1x32xf32, #tpu.memory_space<vmem>>, %arg6: memref<1x32xf32, #tpu.memory_space<vmem>>, %arg7: memref<1x32xf32, #tpu.memory_space<vmem>>, %arg8: memref<32x128xf32, #tpu.memory_space<vmem>>, %arg9: memref<1x128xf32, #tpu.memory_space<vmem>>, %arg10: memref<128x32xf32, #tpu.memory_space<vmem>>, %arg11: memref<1x32xf32, #tpu.memory_space<vmem>>, %arg12: memref<1x32xf32, #tpu.memory_space<vmem>>, %arg13: memref<1x32xf32, #tpu.memory_space<vmem>>, %arg14: memref<32x128xf32, #tpu.memory_space<vmem>>, %arg15: memref<1x128xf32, #tpu.memory_space<vmem>>, %arg16: memref<16x128xf32, #tpu.memory_space<vmem>>) attributes {dimension_semantics = [], scalar_prefetch = 0 : i64, scratch_operands = 0 : i64, tpu.core_type = #tpu.core_type<tc>} {
    %c0 = arith.constant 0 : index
    %c0_0 = arith.constant 0 : index
    %0 = vector.load %arg0[%c0, %c0_0] : memref<16x1xi32, #tpu.memory_space<vmem>>, vector<16x1xi32>
    %1 = tpu.iota {dimensions = array<i32: 1>} : vector<16x64xi32>
    %2 = vector.broadcast %0 : vector<16x1xi32> to vector<16x64xi32>
    %3 = arith.cmpi eq, %2, %1 : vector<16x64xi32>
    %4 = arith.extui %3 : vector<16x64xi1> to vector<16x64xi32>
    %5 = arith.sitofp %4 : vector<16x64xi32> to vector<16x64xf32>
    %c0_1 = arith.constant 0 : index
    %c0_2 = arith.constant 0 : index
    %6 = vector.load %arg1[%c0_1, %c0_2] : memref<64x32xf32, #tpu.memory_space<vmem>>, vector<64x32xf32>
    %cst = arith.constant dense<0.000000e+00> : vector<16x32xf32>
    %7 = tpu.matmul %5, %6, %cst {dimension_numbers = #tpu.dot_dimension_numbers<[1], [0], [0], [1], [0, 0, 1, 1], [], []>} : vector<16x64xf32>, vector<64x32xf32>, vector<16x32xf32> -> vector<16x32xf32>
    %c0_3 = arith.constant 0 : index
    %c0_4 = arith.constant 0 : index
    %8 = vector.load %arg2[%c0_3, %c0_4] : memref<32x96xf32, #tpu.memory_space<vmem>>, vector<32x96xf32>
    %cst_5 = arith.constant dense<0.000000e+00> : vector<16x96xf32>
    %9 = tpu.matmul %7, %8, %cst_5 {dimension_numbers = #tpu.dot_dimension_numbers<[1], [0], [0], [1], [0, 0, 1, 1], [], []>} : vector<16x32xf32>, vector<32x96xf32>, vector<16x96xf32> -> vector<16x96xf32>
    %c0_6 = arith.constant 0 : index
    %c0_7 = arith.constant 0 : index
    %10 = vector.load %arg3[%c0_6, %c0_7] : memref<1x96xf32, #tpu.memory_space<vmem>>, vector<1x96xf32>
    %11 = vector.broadcast %10 : vector<1x96xf32> to vector<16x96xf32>
    %12 = arith.addf %9, %11 : vector<16x96xf32>
    %13 = vector.shape_cast %12 : vector<16x96xf32> to vector<2x8x96xf32>
    %14 = vector.extract_strided_slice %13 {offsets = [0, 0, 0], sizes = [2, 8, 32], strides = [1, 1, 1]} : vector<2x8x96xf32> to vector<2x8x32xf32>
    %15 = vector.extract_strided_slice %13 {offsets = [0, 0, 32], sizes = [2, 8, 32], strides = [1, 1, 1]} : vector<2x8x96xf32> to vector<2x8x32xf32>
    %16 = vector.extract_strided_slice %13 {offsets = [0, 0, 64], sizes = [2, 8, 32], strides = [1, 1, 1]} : vector<2x8x96xf32> to vector<2x8x32xf32>
    "tpu.trace_start"() <{level = 10 : i32, message = "bqd,bkd->bqk"}> : () -> ()
    %cst_8 = arith.constant dense<0.000000e+00> : vector<2x8x8xf32>
    %17 = tpu.matmul %14, %15, %cst_8 {dimension_numbers = #tpu.dot_dimension_numbers<[2], [2], [1], [1], [0, 0, 0, 1, 1, 1], [0], [0]>} : vector<2x8x32xf32>, vector<2x8x32xf32>, vector<2x8x8xf32> -> vector<2x8x8xf32>
    "tpu.trace_stop"() : () -> ()
    %cst_9 = arith.constant 0.176776692 : f32
    %18 = vector.broadcast %cst_9 : f32 to vector<2x8x8xf32>
    %19 = arith.mulf %17, %18 : vector<2x8x8xf32>
    %cst_10 = arith.constant dense<0xFF800000> : vector<2x8xf32>
    %20 = vector.multi_reduction <maximumf>, %19, %cst_10 [2] : vector<2x8x8xf32> to vector<2x8xf32>
    %21 = vector.shape_cast %20 : vector<2x8xf32> to vector<2x8x1xf32>
    %22 = vector.broadcast %21 : vector<2x8x1xf32> to vector<2x8x8xf32>
    %23 = arith.subf %19, %22 : vector<2x8x8xf32>
    %24 = math.exp %23 : vector<2x8x8xf32>
    %cst_11 = arith.constant dense<0.000000e+00> : vector<2x8xf32>
    %25 = vector.multi_reduction <add>, %24, %cst_11 [2] : vector<2x8x8xf32> to vector<2x8xf32>
    %26 = vector.shape_cast %25 : vector<2x8xf32> to vector<2x8x1xf32>
    %27 = vector.broadcast %26 : vector<2x8x1xf32> to vector<2x8x8xf32>
    %28 = arith.divf %24, %27 : vector<2x8x8xf32>
    "tpu.trace_start"() <{level = 10 : i32, message = "bqk,bkd->bqd"}> : () -> ()
    %cst_12 = arith.constant dense<0.000000e+00> : vector<2x8x32xf32>
    %29 = tpu.matmul %28, %16, %cst_12 {dimension_numbers = #tpu.dot_dimension_numbers<[2], [1], [1], [2], [0, 0, 0, 1, 1, 2], [0], [0]>} : vector<2x8x8xf32>, vector<2x8x32xf32>, vector<2x8x32xf32> -> vector<2x8x32xf32>
    "tpu.trace_stop"() : () -> ()
    %30 = vector.shape_cast %29 : vector<2x8x32xf32> to vector<16x32xf32>
    %c0_13 = arith.constant 0 : index
    %c0_14 = arith.constant 0 : index
    %31 = vector.load %arg4[%c0_13, %c0_14] : memref<32x32xf32, #tpu.memory_space<vmem>>, vector<32x32xf32>
    %cst_15 = arith.constant dense<0.000000e+00> : vector<16x32xf32>
    %32 = tpu.matmul %30, %31, %cst_15 {dimension_numbers = #tpu.dot_dimension_numbers<[1], [0], [0], [1], [0, 0, 1, 1], [], []>} : vector<16x32xf32>, vector<32x32xf32>, vector<16x32xf32> -> vector<16x32xf32>
    %c0_16 = arith.constant 0 : index
    %c0_17 = arith.constant 0 : index
    %33 = vector.load %arg5[%c0_16, %c0_17] : memref<1x32xf32, #tpu.memory_space<vmem>>, vector<1x32xf32>
    %34 = vector.broadcast %33 : vector<1x32xf32> to vector<16x32xf32>
    %35 = arith.addf %32, %34 : vector<16x32xf32>
    %36 = arith.addf %7, %35 : vector<16x32xf32>
    %c0_18 = arith.constant 0 : index
    %c0_19 = arith.constant 0 : index
    %37 = vector.load %arg6[%c0_18, %c0_19] : memref<1x32xf32, #tpu.memory_space<vmem>>, vector<1x32xf32>
    %c0_20 = arith.constant 0 : index
    %c0_21 = arith.constant 0 : index
    %38 = vector.load %arg7[%c0_20, %c0_21] : memref<1x32xf32, #tpu.memory_space<vmem>>, vector<1x32xf32>
    %cst_22 = arith.constant dense<0.000000e+00> : vector<16xf32>
    %39 = vector.multi_reduction <add>, %36, %cst_22 [1] : vector<16x32xf32> to vector<16xf32>
    %40 = vector.shape_cast %39 : vector<16xf32> to vector<16x1xf32>
    %cst_23 = arith.constant 3.200000e+01 : f32
    %41 = vector.broadcast %cst_23 : f32 to vector<16x1xf32>
    %42 = arith.divf %40, %41 : vector<16x1xf32>
    %43 = vector.broadcast %42 : vector<16x1xf32> to vector<16x32xf32>
    %44 = arith.subf %36, %43 : vector<16x32xf32>
    %45 = arith.mulf %44, %44 : vector<16x32xf32>
    %cst_24 = arith.constant dense<0.000000e+00> : vector<16xf32>
    %46 = vector.multi_reduction <add>, %45, %cst_24 [1] : vector<16x32xf32> to vector<16xf32>
    %47 = vector.shape_cast %46 : vector<16xf32> to vector<16x1xf32>
    %cst_25 = arith.constant 3.200000e+01 : f32
    %48 = vector.broadcast %cst_25 : f32 to vector<16x1xf32>
    %49 = arith.divf %47, %48 : vector<16x1xf32>
    %50 = vector.broadcast %42 : vector<16x1xf32> to vector<16x32xf32>
    %51 = arith.subf %36, %50 : vector<16x32xf32>
    %cst_26 = arith.constant 9.99999996E-13 : f32
    %52 = vector.broadcast %cst_26 : f32 to vector<16x1xf32>
    %53 = arith.addf %49, %52 : vector<16x1xf32>
    %54 = math.rsqrt %53 : vector<16x1xf32>
    %55 = vector.broadcast %54 : vector<16x1xf32> to vector<16x32xf32>
    %56 = arith.mulf %51, %55 : vector<16x32xf32>
    %57 = vector.broadcast %37 : vector<1x32xf32> to vector<16x32xf32>
    %58 = arith.mulf %56, %57 : vector<16x32xf32>
    %59 = vector.broadcast %38 : vector<1x32xf32> to vector<16x32xf32>
    %60 = arith.addf %58, %59 : vector<16x32xf32>
    %c0_27 = arith.constant 0 : index
    %c0_28 = arith.constant 0 : index
    %61 = vector.load %arg8[%c0_27, %c0_28] : memref<32x128xf32, #tpu.memory_space<vmem>>, vector<32x128xf32>
    %cst_29 = arith.constant dense<0.000000e+00> : vector<16x128xf32>
    %62 = tpu.matmul %60, %61, %cst_29 {dimension_numbers = #tpu.dot_dimension_numbers<[1], [0], [0], [1], [0, 0, 1, 1], [], []>} : vector<16x32xf32>, vector<32x128xf32>, vector<16x128xf32> -> vector<16x128xf32>
    %c0_30 = arith.constant 0 : index
    %c0_31 = arith.constant 0 : index
    %63 = vector.load %arg9[%c0_30, %c0_31] : memref<1x128xf32, #tpu.memory_space<vmem>>, vector<1x128xf32>
    %64 = vector.broadcast %63 : vector<1x128xf32> to vector<16x128xf32>
    %65 = arith.addf %62, %64 : vector<16x128xf32>
    %cst_32 = arith.constant 5.000000e-01 : f32
    %66 = vector.broadcast %cst_32 : f32 to vector<16x128xf32>
    %67 = arith.mulf %66, %65 : vector<16x128xf32>
    %cst_33 = arith.constant 0.707106769 : f32
    %68 = vector.broadcast %cst_33 : f32 to vector<16x128xf32>
    %69 = arith.mulf %65, %68 : vector<16x128xf32>
    %70 = math.erf %69 : vector<16x128xf32>
    %cst_34 = arith.constant 1.000000e+00 : f32
    %71 = vector.broadcast %cst_34 : f32 to vector<16x128xf32>
    %72 = arith.addf %71, %70 : vector<16x128xf32>
    %73 = arith.mulf %67, %72 : vector<16x128xf32>
    %c0_35 = arith.constant 0 : index
    %c0_36 = arith.constant 0 : index
    %74 = vector.load %arg10[%c0_35, %c0_36] : memref<128x32xf32, #tpu.memory_space<vmem>>, vector<128x32xf32>
    %cst_37 = arith.constant dense<0.000000e+00> : vector<16x32xf32>
    %75 = tpu.matmul %73, %74, %cst_37 {dimension_numbers = #tpu.dot_dimension_numbers<[1], [0], [0], [1], [0, 0, 1, 1], [], []>} : vector<16x128xf32>, vector<128x32xf32>, vector<16x32xf32> -> vector<16x32xf32>
    %c0_38 = arith.constant 0 : index
    %c0_39 = arith.constant 0 : index
    %76 = vector.load %arg11[%c0_38, %c0_39] : memref<1x32xf32, #tpu.memory_space<vmem>>, vector<1x32xf32>
    %77 = vector.broadcast %76 : vector<1x32xf32> to vector<16x32xf32>
    %78 = arith.addf %75, %77 : vector<16x32xf32>
    %79 = arith.addf %60, %78 : vector<16x32xf32>
    %c0_40 = arith.constant 0 : index
    %c0_41 = arith.constant 0 : index
    %80 = vector.load %arg12[%c0_40, %c0_41] : memref<1x32xf32, #tpu.memory_space<vmem>>, vector<1x32xf32>
    %c0_42 = arith.constant 0 : index
    %c0_43 = arith.constant 0 : index
    %81 = vector.load %arg13[%c0_42, %c0_43] : memref<1x32xf32, #tpu.memory_space<vmem>>, vector<1x32xf32>
    %cst_44 = arith.constant dense<0.000000e+00> : vector<16xf32>
    %82 = vector.multi_reduction <add>, %79, %cst_44 [1] : vector<16x32xf32> to vector<16xf32>
    %83 = vector.shape_cast %82 : vector<16xf32> to vector<16x1xf32>
    %cst_45 = arith.constant 3.200000e+01 : f32
    %84 = vector.broadcast %cst_45 : f32 to vector<16x1xf32>
    %85 = arith.divf %83, %84 : vector<16x1xf32>
    %86 = vector.broadcast %85 : vector<16x1xf32> to vector<16x32xf32>
    %87 = arith.subf %79, %86 : vector<16x32xf32>
    %88 = arith.mulf %87, %87 : vector<16x32xf32>
    %cst_46 = arith.constant dense<0.000000e+00> : vector<16xf32>
    %89 = vector.multi_reduction <add>, %88, %cst_46 [1] : vector<16x32xf32> to vector<16xf32>
    %90 = vector.shape_cast %89 : vector<16xf32> to vector<16x1xf32>
    %cst_47 = arith.constant 3.200000e+01 : f32
    %91 = vector.broadcast %cst_47 : f32 to vector<16x1xf32>
    %92 = arith.divf %90, %91 : vector<16x1xf32>
    %93 = vector.broadcast %85 : vector<16x1xf32> to vector<16x32xf32>
    %94 = arith.subf %79, %93 : vector<16x32xf32>
    %cst_48 = arith.constant 9.99999996E-13 : f32
    %95 = vector.broadcast %cst_48 : f32 to vector<16x1xf32>
    %96 = arith.addf %92, %95 : vector<16x1xf32>
    %97 = math.rsqrt %96 : vector<16x1xf32>
    %98 = vector.broadcast %97 : vector<16x1xf32> to vector<16x32xf32>
    %99 = arith.mulf %94, %98 : vector<16x32xf32>
    %100 = vector.broadcast %80 : vector<1x32xf32> to vector<16x32xf32>
    %101 = arith.mulf %99, %100 : vector<16x32xf32>
    %102 = vector.broadcast %81 : vector<1x32xf32> to vector<16x32xf32>
    %103 = arith.addf %101, %102 : vector<16x32xf32>
    %cst_49 = arith.constant 5.000000e-01 : f32
    %104 = vector.broadcast %cst_49 : f32 to vector<16x32xf32>
    %105 = arith.mulf %104, %103 : vector<16x32xf32>
    %cst_50 = arith.constant 0.707106769 : f32
    %106 = vector.broadcast %cst_50 : f32 to vector<16x32xf32>
    %107 = arith.mulf %103, %106 : vector<16x32xf32>
    %108 = math.erf %107 : vector<16x32xf32>
    %cst_51 = arith.constant 1.000000e+00 : f32
    %109 = vector.broadcast %cst_51 : f32 to vector<16x32xf32>
    %110 = arith.addf %109, %108 : vector<16x32xf32>
    %111 = arith.mulf %105, %110 : vector<16x32xf32>
    %c0_52 = arith.constant 0 : index
    %c0_53 = arith.constant 0 : index
    %112 = vector.load %arg14[%c0_52, %c0_53] : memref<32x128xf32, #tpu.memory_space<vmem>>, vector<32x128xf32>
    %cst_54 = arith.constant dense<0.000000e+00> : vector<16x128xf32>
    %113 = tpu.matmul %111, %112, %cst_54 {dimension_numbers = #tpu.dot_dimension_numbers<[1], [0], [0], [1], [0, 0, 1, 1], [], []>} : vector<16x32xf32>, vector<32x128xf32>, vector<16x128xf32> -> vector<16x128xf32>
    %c0_55 = arith.constant 0 : index
    %c0_56 = arith.constant 0 : index
    %114 = vector.load %arg15[%c0_55, %c0_56] : memref<1x128xf32, #tpu.memory_space<vmem>>, vector<1x128xf32>
    %115 = vector.broadcast %114 : vector<1x128xf32> to vector<16x128xf32>
    %116 = arith.addf %113, %115 : vector<16x128xf32>
    %c0_57 = arith.constant 0 : index
    %c0_58 = arith.constant 0 : index
    %117 = vector.load %arg16[%c0_57, %c0_58] : memref<16x128xf32, #tpu.memory_space<vmem>>, vector<16x128xf32>
    tpu.vector_store %arg16[%c0_57, %c0_58], %116 {strides = array<i32>} : memref<16x128xf32, #tpu.memory_space<vmem>>, vector<16x128xf32>,
    return
  }
}

</mosaic_0001>

<llo_original>
// kernel: tpu_custom_call.1
$region0: #{tpu_custom_call.1}
  #allocation0 [shape = 'u32[]', space=smem, size = 0x4, offset = 0x4, fixed_abs, tag = 'smem constant byte address 0x4 - core index']
  #allocation1 [shape = 'u32[144,128]{1,0:T(1,128)}', space=vmem, size = 0x12000, scoped, tag = 'internal scratch']
  %s0 = inlined_call_operand.vmem [shape: s32[16,1], index: 0, kind: input, shape index: {}]
  %s1 = inlined_call_operand.vmem [shape: f32[64,32], index: 1, kind: input, shape index: {}]
  %s2 = inlined_call_operand.vmem [shape: f32[32,96], index: 2, kind: input, shape index: {}]
  %s3 = inlined_call_operand.vmem [shape: f32[1,96], index: 3, kind: input, shape index: {}]
  %s4 = inlined_call_operand.vmem [shape: f32[32,32], index: 4, kind: input, shape index: {}]
  %s5 = inlined_call_operand.vmem [shape: f32[1,32], index: 5, kind: input, shape index: {}]
  %s6 = inlined_call_operand.vmem [shape: f32[1,32], index: 6, kind: input, shape index: {}]
  %s7 = inlined_call_operand.vmem [shape: f32[1,32], index: 7, kind: input, shape index: {}]
  %s8 = inlined_call_operand.vmem [shape: f32[32,128], index: 8, kind: input, shape index: {}]
  %s9 = inlined_call_operand.vmem [shape: f32[1,128], index: 9, kind: input, shape index: {}]
  %s10 = inlined_call_operand.vmem [shape: f32[128,32], index: 10, kind: input, shape index: {}]
  %s11 = inlined_call_operand.vmem [shape: f32[1,32], index: 11, kind: input, shape index: {}]
  %s12 = inlined_call_operand.vmem [shape: f32[1,32], index: 12, kind: input, shape index: {}]
  %s13 = inlined_call_operand.vmem [shape: f32[1,32], index: 13, kind: input, shape index: {}]
  %s14 = inlined_call_operand.vmem [shape: f32[32,128], index: 14, kind: input, shape index: {}]
  %s15 = inlined_call_operand.vmem [shape: f32[1,128], index: 15, kind: input, shape index: {}]
  %s16 = inlined_call_operand.hbm [shape: f32[16,128], index: 16, kind: output, shape index: {}]
  %s17 = sld [smem:[#allocation0]]
  $region74: #{tpu_custom_call.1} parent=0
    _
  %s19 = ssub.s32 1, %s17
  %s20 = scalar_select 0, %s19, %s17
  $region1: #{tpu_custom_call.1} parent=0
    #allocation2 [shape = 'u8[8192]{0}', space=vmem, size = 0x2000, scoped, tag = 'output window, operand 0, single buffered']
    #allocation3 [shape = 's32[1]{0}', space=sflag, size = 0x4, scoped, tag = 'scoped memory for tpu_custom_call.1']
    %21 = vsyncpa [#allocation3], 0
    // Predicated region
    $region2: #{tpu_custom_call.1} parent=1 // pred_check
      _
    $region3: #{tpu_custom_call.1} parent=1 // pred_check_branch
      %23 = sbr.rel (0) target = $region5
    $region4: #{tpu_custom_call.1} parent=1 // pred_region
      _
    $region5: #{tpu_custom_call.1} parent=1 // pred_fallthru
      _
    // Predicated region
    $region6: #{tpu_custom_call.1} parent=1 // pred_check
      _
    $region7: #{tpu_custom_call.1} parent=1 // pred_check_branch
      %25 = sbr.rel (0) target = $region9
    $region8: #{tpu_custom_call.1} parent=1 // pred_region
      _
    $region9: #{tpu_custom_call.1} parent=1 // pred_fallthru
      _
    // Predicated region
    $region10: #{tpu_custom_call.1} parent=1 // pred_check
      _
    $region11: #{tpu_custom_call.1} parent=1 // pred_check_branch
      %27 = sbr.rel (0) target = $region13
    $region12: #{tpu_custom_call.1} parent=1 // pred_region
      _
    $region13: #{tpu_custom_call.1} parent=1 // pred_fallthru
      _
    // Predicated region
    $region14: #{tpu_custom_call.1} parent=1 // pred_check
      _
    $region15: #{tpu_custom_call.1} parent=1 // pred_check_branch
      %29 = sbr.rel (0) target = $region17
    $region16: #{tpu_custom_call.1} parent=1 // pred_region
      _
    $region17: #{tpu_custom_call.1} parent=1 // pred_fallthru
      _
    // Predicated region
    $region18: #{tpu_custom_call.1} parent=1 // pred_check
      _
    $region19: #{tpu_custom_call.1} parent=1 // pred_check_branch
      %31 = sbr.rel (0) target = $region21
    $region20: #{tpu_custom_call.1} parent=1 // pred_region
      _
    $region21: #{tpu_custom_call.1} parent=1 // pred_fallthru
      _
    // Predicated region
    $region22: #{tpu_custom_call.1} parent=1 // pred_check
      _
    $region23: #{tpu_custom_call.1} parent=1 // pred_check_branch
      %33 = sbr.rel (0) target = $region25
    $region24: #{tpu_custom_call.1} parent=1 // pred_region
      _
    $region25: #{tpu_custom_call.1} parent=1 // pred_fallthru
      _
    // Predicated region
    $region26: #{tpu_custom_call.1} parent=1 // pred_check
      _
    $region27: #{tpu_custom_call.1} parent=1 // pred_check_branch
      %35 = sbr.rel (0) target = $region29
    $region28: #{tpu_custom_call.1} parent=1 // pred_region
      _
    $region29: #{tpu_custom_call.1} parent=1 // pred_fallthru
      _
    // Predicated region
    $region30: #{tpu_custom_call.1} parent=1 // pred_check
      _
    $region31: #{tpu_custom_call.1} parent=1 // pred_check_branch
      %37 = sbr.rel (0) target = $region33
    $region32: #{tpu_custom_call.1} parent=1 // pred_region
      _
    $region33: #{tpu_custom_call.1} parent=1 // pred_fallthru
      _
    // Predicated region
    $region34: #{tpu_custom_call.1} parent=1 // pred_check
      _
    $region35: #{tpu_custom_call.1} parent=1 // pred_check_branch
      %39 = sbr.rel (0) target = $region37
    $region36: #{tpu_custom_call.1} parent=1 // pred_region
      _
    $region37: #{tpu_custom_call.1} parent=1 // pred_fallthru
      _
    // Predicated region
    $region38: #{tpu_custom_call.1} parent=1 // pred_check
      _
    $region39: #{tpu_custom_call.1} parent=1 // pred_check_branch
      %41 = sbr.rel (0) target = $region41
    $region40: #{tpu_custom_call.1} parent=1 // pred_region
      _
    $region41: #{tpu_custom_call.1} parent=1 // pred_fallthru
      _
    // Predicated region
    $region42: #{tpu_custom_call.1} parent=1 // pred_check
      _
    $region43: #{tpu_custom_call.1} parent=1 // pred_check_branch
      %43 = sbr.rel (0) target = $region45
    $region44: #{tpu_custom_call.1} parent=1 // pred_region
      _
    $region45: #{tpu_custom_call.1} parent=1 // pred_fallthru
      _
    // Predicated region
    $region46: #{tpu_custom_call.1} parent=1 // pred_check
      _
    $region47: #{tpu_custom_call.1} parent=1 // pred_check_branch
      %45 = sbr.rel (0) target = $region49
    $region48: #{tpu_custom_call.1} parent=1 // pred_region
      _
    $region49: #{tpu_custom_call.1} parent=1 // pred_fallthru
      _
    // Predicated region
    $region50: #{tpu_custom_call.1} parent=1 // pred_check
      _
    $region51: #{tpu_custom_call.1} parent=1 // pred_check_branch
      %47 = sbr.rel (0) target = $region53
    $region52: #{tpu_custom_call.1} parent=1 // pred_region
      _
    $region53: #{tpu_custom_call.1} parent=1 // pred_fallthru
      _
    // Predicated region
    $region54: #{tpu_custom_call.1} parent=1 // pred_check
      _
    $region55: #{tpu_custom_call.1} parent=1 // pred_check_branch
      %49 = sbr.rel (0) target = $region57
    $region56: #{tpu_custom_call.1} parent=1 // pred_region
      _
    $region57: #{tpu_custom_call.1} parent=1 // pred_fallthru
      _
    // Predicated region
    $region58: #{tpu_custom_call.1} parent=1 // pred_check
      _
    $region59: #{tpu_custom_call.1} parent=1 // pred_check_branch
      %51 = sbr.rel (0) target = $region61
    $region60: #{tpu_custom_call.1} parent=1 // pred_region
      _
    $region61: #{tpu_custom_call.1} parent=1 // pred_fallthru
      _
    // Predicated region
    $region62: #{tpu_custom_call.1} parent=1 // pred_check
      _
    $region63: #{tpu_custom_call.1} parent=1 // pred_check_branch
      %53 = sbr.rel (0) target = $region65
    $region64: #{tpu_custom_call.1} parent=1 // pred_region
      _
    $region65: #{tpu_custom_call.1} parent=1 // pred_fallthru
      _
    %v54 = vld [vmem:[%s0] sm:$0xff]
    %v55 = vld [vmem:[%s0 + $0x8] sm:$0xff]
    %v56 = vlaneseq
    %v57 = vand.u32 %v56, 127
    %58 = vset.pattern.permute.xlu0 0
    %59 = vperm.xlu0 %58, %v54
    %v60 = vpop.permute.xlu0 %59
    %61 = vset.pattern.permute.xlu0 0
    %62 = vperm.xlu0 %61, %v55
    %v63 = vpop.permute.xlu0 %62
    %vm64 = vcmp.eq.s32.totalorder %v60, %v57
    %vm65 = vcmp.eq.s32.totalorder %v63, %v57
    %v66 = vsel %vm64, 1, 0
    %v67 = vsel %vm65, 1, 0
    %v68 = vcvt.s32.f32 %v66
    %v69 = vcvt.s32.f32 %v67
    %v70 = vld [vmem:[%s1] sm:$0xff]
    %v71 = vld [vmem:[%s1 + $0x8] sm:$0xff]
    %v72 = vld [vmem:[%s1 + $0x10] sm:$0xff]
    %v73 = vld [vmem:[%s1 + $0x18] sm:$0xff]
    %v74 = vld [vmem:[%s1 + $0x20] sm:$0xff]
    %v75 = vld [vmem:[%s1 + $0x28] sm:$0xff]
    %v76 = vld [vmem:[%s1 + $0x30] sm:$0xff]
    %v77 = vld [vmem:[%s1 + $0x38] sm:$0xff]
    %vm78 = vcmask 523264
    %v80 = vsel %vm78, %v68, 0
    %v83 = vsel %vm78, %v69, 0
    %85 = vmatprep.subr.mxu0 0.0
    %86 = vmatpush1.msra.mxu0 %v70
    %87 = vmatprep.subr.mxu0 0.0
    %88 = vmatpush1.msra.mxu0 %v71
    %89 = vmatprep.subr.mxu0 0.0
    %90 = vmatpush1.msra.mxu0 %v72
    %91 = vmatprep.subr.mxu0 0.0
    %92 = vmatpush1.msra.mxu0 %v73
    %93 = vmatprep.subr.mxu0 0.0
    %94 = vmatpush1.msra.mxu0 %v74
    %95 = vmatprep.subr.mxu0 0.0
    %96 = vmatpush1.msra.mxu0 %v75
    %97 = vmatprep.subr.mxu0 0.0
    %98 = vmatpush1.msra.mxu0 %v76
    %99 = vmatprep.subr.mxu0 0.0
    %100 = vmatpush1.msra.mxu0 %v77
    %101 = vmatprep.subr.mxu0 0.0
    %102 = vmatpush1.msra.mxu0 0.0
    %103 = vmatprep.subr.mxu0 0.0
    %104 = vmatpush1.msra.mxu0 0.0
    %105 = vmatprep.subr.mxu0 0.0
    %106 = vmatpush1.msra.mxu0 0.0
    %107 = vmatprep.subr.mxu0 0.0
    %108 = vmatpush1.msra.mxu0 0.0
    %109 = vmatprep.subr.mxu0 0.0
    %110 = vmatpush1.msra.mxu0 0.0
    %111 = vmatprep.subr.mxu0 0.0
    %112 = vmatpush1.msra.mxu0 0.0
    %113 = vmatprep.subr.mxu0 0.0
    %114 = vmatpush1.msra.mxu0 0.0
    %115 = vmatprep.subr.mxu0 0.0
    %116 = vmatpush1.msra.mxu0 0.0
    %117 = vmatprep.subr.mxu0 0.0
    %118 = vmatpush1.msra.mxu0 0.0
    %119 = vmatprep.subr.mxu0 0.0
    %120 = vmatpush1.msra.mxu0 0.0
    %121 = vmatprep.subr.mxu0 0.0
    %122 = vmatpush1.msra.mxu0 0.0
    %123 = vmatprep.subr.mxu0 0.0
    %124 = vmatpush1.msra.mxu0 0.0
    %125 = vmatprep.subr.mxu0 0.0
    %126 = vmatpush1.msra.mxu0 0.0
    %127 = vmatprep.subr.mxu0 0.0
    %128 = vmatpush1.msra.mxu0 0.0
    %129 = vmatprep.subr.mxu0 0.0
    %130 = vmatpush1.msra.mxu0 0.0
    %131 = vmatprep.subr.mxu0 0.0
    %132 = vmatpush1.msra.mxu0 0.0
    %133 = vmatprep.subr.mxu0 0.0
    %134 = vmatpush1.msra.mxu0 0.0
    %135 = vmatprep.subr.mxu0 0.0
    %136 = vmatpush1.msra.mxu0 0.0
    %137 = vmatprep.subr.mxu0 0.0
    %138 = vmatpush1.msra.mxu0 0.0
    %139 = vmatprep.subr.mxu0 0.0
    %140 = vmatpush1.msra.mxu0 0.0
    %141 = vmatprep.subr.mxu0 0.0
    %142 = vmatpush1.msra.mxu0 0.0
    %143 = vmatprep.subr.mxu0 0.0
    %144 = vmatpush1.msra.mxu0 0.0
    %145 = vmatprep.subr.mxu0 0.0
    %146 = vmatpush1.msra.mxu0 0.0
    %147 = vmatprep.subr.mxu0 0.0
    %148 = vmatpush1.msra.mxu0 0.0
    %149 = vmatprep.mubr.f32.mxu0 0.0
    %150 = vmatmul.mubr.f32.gmra.mrb[0].mxu0 %v80
    %v151 = vpop.f32.mrb[0].mxu0
    %v152 = vadd.f32 0.0, %v151
    %v153 = vpop.f32.mrb[0].mxu0
    %154 = vmatprep.mubr.f32.mxu0 0.0
    %155 = vmatmul.mubr.f32.gmra.mrb[0].mxu0 %v83
    %v156 = vpop.f32.mrb[0].mxu0
    %v157 = vadd.f32 0.0, %v156
    %v158 = vpop.f32.mrb[0].mxu0
    %159 = vdwg.mxu0
    %v160 = vld [vmem:[%s2] sm:$0xff]
    %v161 = vld [vmem:[%s2 + $0x8] sm:$0xff]
    %v162 = vld [vmem:[%s2 + $0x10] sm:$0xff]
    %v163 = vld [vmem:[%s2 + $0x18] sm:$0xff]
    %v164 = vld [vmem:[%s3] sm:$0x1]
    %v166 = vlaneseq
    %v167 = vshrl.u32 %v166, 7
    %v168 = vsub.s32 0, %v167
    %v169 = vrot.slane %v164, %v168
    %vm171 = vcmask 261120
    %v173 = vsel %vm171, %v152, 0
    %v176 = vsel %vm171, %v157, 0
    %178 = vmatprep.subr.mxu0 0.0
    %179 = vmatpush1.msra.mxu0 %v160
    %180 = vmatprep.subr.mxu0 0.0
    %181 = vmatpush1.msra.mxu0 %v161
    %182 = vmatprep.subr.mxu0 0.0
    %183 = vmatpush1.msra.mxu0 %v162
    %184 = vmatprep.subr.mxu0 0.0
    %185 = vmatpush1.msra.mxu0 %v163
    %186 = vmatprep.subr.mxu0 0.0
    %187 = vmatpush1.msra.mxu0 0.0
    %188 = vmatprep.subr.mxu0 0.0
    %189 = vmatpush1.msra.mxu0 0.0
    %190 = vmatprep.subr.mxu0 0.0
    %191 = vmatpush1.msra.mxu0 0.0
    %192 = vmatprep.subr.mxu0 0.0
    %193 = vmatpush1.msra.mxu0 0.0
    %194 = vmatprep.subr.mxu0 0.0
    %195 = vmatpush1.msra.mxu0 0.0
    %196 = vmatprep.subr.mxu0 0.0
    %197 = vmatpush1.msra.mxu0 0.0
    %198 = vmatprep.subr.mxu0 0.0
    %199 = vmatpush1.msra.mxu0 0.0
    %200 = vmatprep.subr.mxu0 0.0
    %201 = vmatpush1.msra.mxu0 0.0
    %202 = vmatprep.subr.mxu0 0.0
    %203 = vmatpush1.msra.mxu0 0.0
    %204 = vmatprep.subr.mxu0 0.0
    %205 = vmatpush1.msra.mxu0 0.0
    %206 = vmatprep.subr.mxu0 0.0
    %207 = vmatpush1.msra.mxu0 0.0
    %208 = vmatprep.subr.mxu0 0.0
    %209 = vmatpush1.msra.mxu0 0.0
    %210 = vmatprep.subr.mxu0 0.0
    %211 = vmatpush1.msra.mxu0 0.0
    %212 = vmatprep.subr.mxu0 0.0
    %213 = vmatpush1.msra.mxu0 0.0
    %214 = vmatprep.subr.mxu0 0.0
    %215 = vmatpush1.msra.mxu0 0.0
    %216 = vmatprep.subr.mxu0 0.0
    %217 = vmatpush1.msra.mxu0 0.0
    %218 = vmatprep.subr.mxu0 0.0
    %219 = vmatpush1.msra.mxu0 0.0
    %220 = vmatprep.subr.mxu0 0.0
    %221 = vmatpush1.msra.mxu0 0.0
    %222 = vmatprep.subr.mxu0 0.0
    %223 = vmatpush1.msra.mxu0 0.0
    %224 = vmatprep.subr.mxu0 0.0
    %225 = vmatpush1.msra.mxu0 0.0
    %226 = vmatprep.subr.mxu0 0.0
    %227 = vmatpush1.msra.mxu0 0.0
    %228 = vmatprep.subr.mxu0 0.0
    %229 = vmatpush1.msra.mxu0 0.0
    %230 = vmatprep.subr.mxu0 0.0
    %231 = vmatpush1.msra.mxu0 0.0
    %232 = vmatprep.subr.mxu0 0.0
    %233 = vmatpush1.msra.mxu0 0.0
    %234 = vmatprep.subr.mxu0 0.0
    %235 = vmatpush1.msra.mxu0 0.0
    %236 = vmatprep.subr.mxu0 0.0
    %237 = vmatpush1.msra.mxu0 0.0
    %238 = vmatprep.subr.mxu0 0.0
    %239 = vmatpush1.msra.mxu0 0.0
    %240 = vmatprep.subr.mxu0 0.0
    %241 = vmatpush1.msra.mxu0 0.0
    %242 = vmatprep.mubr.f32.mxu0 0.0
    %243 = vmatmul.mubr.f32.gmra.mrb[0].mxu0 %v173
    %v244 = vpop.f32.mrb[0].mxu0
    %v245 = vadd.f32 %v169, %v244
    %v246 = vpop.f32.mrb[0].mxu0
    %247 = vmatprep.mubr.f32.mxu0 0.0
    %248 = vmatmul.mubr.f32.gmra.mrb[0].mxu0 %v176
    %v249 = vpop.f32.mrb[0].mxu0
    %v250 = vadd.f32 %v169, %v249
    %v251 = vpop.f32.mrb[0].mxu0
    %252 = vdwg.mxu0
    %254 = vrot.lane.b32.xlu0 %v245, 96
    %v255 = vpop.permute.xlu0 %254
    %v256 = vsel %vm171, %v245, 0
    %v258 = vsel %vm171, %v255, 0
    %260 = vmatprep.subr.mxu0 0.0
    %261 = vmatpush1.xpose.msra.mxu0 %v258
    %262 = vmatprep.subr.mxu0 0.0
    %263 = vmatpush1.xpose.msra.mxu0 0.0
    %264 = vmatprep.subr.mxu0 0.0
    %265 = vmatpush1.xpose.msra.mxu0 0.0
    %266 = vmatprep.subr.mxu0 0.0
    %267 = vmatpush1.xpose.msra.mxu0 0.0
    %268 = vmatprep.subr.mxu0 0.0
    %269 = vmatpush1.xpose.msra.mxu0 0.0
    %270 = vmatprep.subr.mxu0 0.0
    %271 = vmatpush1.xpose.msra.mxu0 0.0
    %272 = vmatprep.subr.mxu0 0.0
    %273 = vmatpush1.xpose.msra.mxu0 0.0
    %274 = vmatprep.subr.mxu0 0.0
    %275 = vmatpush1.xpose.msra.mxu0 0.0
    %276 = vmatprep.subr.mxu0 0.0
    %277 = vmatpush1.xpose.msra.mxu0 0.0
    %278 = vmatprep.subr.mxu0 0.0
    %279 = vmatpush1.xpose.msra.mxu0 0.0
    %280 = vmatprep.subr.mxu0 0.0
    %281 = vmatpush1.xpose.msra.mxu0 0.0
    %282 = vmatprep.subr.mxu0 0.0
    %283 = vmatpush1.xpose.msra.mxu0 0.0
    %284 = vmatprep.subr.mxu0 0.0
    %285 = vmatpush1.xpose.msra.mxu0 0.0
    %286 = vmatprep.subr.mxu0 0.0
    %287 = vmatpush1.xpose.msra.mxu0 0.0
    %288 = vmatprep.subr.mxu0 0.0
    %289 = vmatpush1.xpose.msra.mxu0 0.0
    %290 = vmatprep.subr.mxu0 0.0
    %291 = vmatpush1.xpose.msra.mxu0 0.0
    %292 = vmatprep.subr.mxu0 0.0
    %293 = vmatpush1.xpose.msra.mxu0 0.0
    %294 = vmatprep.subr.mxu0 0.0
    %295 = vmatpush1.xpose.msra.mxu0 0.0
    %296 = vmatprep.subr.mxu0 0.0
    %297 = vmatpush1.xpose.msra.mxu0 0.0
    %298 = vmatprep.subr.mxu0 0.0
    %299 = vmatpush1.xpose.msra.mxu0 0.0
    %300 = vmatprep.subr.mxu0 0.0
    %301 = vmatpush1.xpose.msra.mxu0 0.0
    %302 = vmatprep.subr.mxu0 0.0
    %303 = vmatpush1.xpose.msra.mxu0 0.0
    %304 = vmatprep.subr.mxu0 0.0
    %305 = vmatpush1.xpose.msra.mxu0 0.0
    %306 = vmatprep.subr.mxu0 0.0
    %307 = vmatpush1.xpose.msra.mxu0 0.0
    %308 = vmatprep.subr.mxu0 0.0
    %309 = vmatpush1.xpose.msra.mxu0 0.0
    %310 = vmatprep.subr.mxu0 0.0
    %311 = vmatpush1.xpose.msra.mxu0 0.0
    %312 = vmatprep.subr.mxu0 0.0
    %313 = vmatpush1.xpose.msra.mxu0 0.0
    %314 = vmatprep.subr.mxu0 0.0
    %315 = vmatpush1.xpose.msra.mxu0 0.0
    %316 = vmatprep.subr.mxu0 0.0
    %317 = vmatpush1.xpose.msra.mxu0 0.0
    %318 = vmatprep.subr.mxu0 0.0
    %319 = vmatpush1.xpose.msra.mxu0 0.0
    %320 = vmatprep.subr.mxu0 0.0
    %321 = vmatpush1.xpose.msra.mxu0 0.0
    %322 = vmatprep.subr.mxu0 0.0
    %323 = vmatpush1.xpose.msra.mxu0 0.0
    %324 = vmatprep.mubr.f32.mxu0 0.0
    %325 = vmatmul.mubr.f32.gmra.mrb[0].mxu0 %v256
    %v326 = vpop.f32.mrb[0].mxu0
    %v327 = vadd.f32 0.0, %v326
    %v328 = vpop.f32.mrb[0].mxu0
    %329 = vdwg.mxu0
    %331 = vrot.lane.b32.xlu0 %v250, 96
    %v332 = vpop.permute.xlu0 %331
    %v333 = vsel %vm171, %v250, 0
    %v335 = vsel %vm171, %v332, 0
    %337 = vmatprep.subr.mxu0 0.0
    %338 = vmatpush1.xpose.msra.mxu0 %v335
    %339 = vmatprep.subr.mxu0 0.0
    %340 = vmatpush1.xpose.msra.mxu0 0.0
    %341 = vmatprep.subr.mxu0 0.0
    %342 = vmatpush1.xpose.msra.mxu0 0.0
    %343 = vmatprep.subr.mxu0 0.0
    %344 = vmatpush1.xpose.msra.mxu0 0.0
    %345 = vmatprep.subr.mxu0 0.0
    %346 = vmatpush1.xpose.msra.mxu0 0.0
    %347 = vmatprep.subr.mxu0 0.0
    %348 = vmatpush1.xpose.msra.mxu0 0.0
    %349 = vmatprep.subr.mxu0 0.0
    %350 = vmatpush1.xpose.msra.mxu0 0.0
    %351 = vmatprep.subr.mxu0 0.0
    %352 = vmatpush1.xpose.msra.mxu0 0.0
    %353 = vmatprep.subr.mxu0 0.0
    %354 = vmatpush1.xpose.msra.mxu0 0.0
    %355 = vmatprep.subr.mxu0 0.0
    %356 = vmatpush1.xpose.msra.mxu0 0.0
    %357 = vmatprep.subr.mxu0 0.0
    %358 = vmatpush1.xpose.msra.mxu0 0.0
    %359 = vmatprep.subr.mxu0 0.0
    %360 = vmatpush1.xpose.msra.mxu0 0.0
    %361 = vmatprep.subr.mxu0 0.0
    %362 = vmatpush1.xpose.msra.mxu0 0.0
    %363 = vmatprep.subr.mxu0 0.0
    %364 = vmatpush1.xpose.msra.mxu0 0.0
    %365 = vmatprep.subr.mxu0 0.0
    %366 = vmatpush1.xpose.msra.mxu0 0.0
    %367 = vmatprep.subr.mxu0 0.0
    %368 = vmatpush1.xpose.msra.mxu0 0.0
    %369 = vmatprep.subr.mxu0 0.0
    %370 = vmatpush1.xpose.msra.mxu0 0.0
    %371 = vmatprep.subr.mxu0 0.0
    %372 = vmatpush1.xpose.msra.mxu0 0.0
    %373 = vmatprep.subr.mxu0 0.0
    %374 = vmatpush1.xpose.msra.mxu0 0.0
    %375 = vmatprep.subr.mxu0 0.0
    %376 = vmatpush1.xpose.msra.mxu0 0.0
    %377 = vmatprep.subr.mxu0 0.0
    %378 = vmatpush1.xpose.msra.mxu0 0.0
    %379 = vmatprep.subr.mxu0 0.0
    %380 = vmatpush1.xpose.msra.mxu0 0.0
    %381 = vmatprep.subr.mxu0 0.0
    %382 = vmatpush1.xpose.msra.mxu0 0.0
    %383 = vmatprep.subr.mxu0 0.0
    %384 = vmatpush1.xpose.msra.mxu0 0.0
    %385 = vmatprep.subr.mxu0 0.0
    %386 = vmatpush1.xpose.msra.mxu0 0.0
    %387 = vmatprep.subr.mxu0 0.0
    %388 = vmatpush1.xpose.msra.mxu0 0.0
    %389 = vmatprep.subr.mxu0 0.0
    %390 = vmatpush1.xpose.msra.mxu0 0.0
    %391 = vmatprep.subr.mxu0 0.0
    %392 = vmatpush1.xpose.msra.mxu0 0.0
    %393 = vmatprep.subr.mxu0 0.0
    %394 = vmatpush1.xpose.msra.mxu0 0.0
    %395 = vmatprep.subr.mxu0 0.0
    %396 = vmatpush1.xpose.msra.mxu0 0.0
    %397 = vmatprep.subr.mxu0 0.0
    %398 = vmatpush1.xpose.msra.mxu0 0.0
    %399 = vmatprep.subr.mxu0 0.0
    %400 = vmatpush1.xpose.msra.mxu0 0.0
    %401 = vmatprep.mubr.f32.mxu0 0.0
    %402 = vmatmul.mubr.f32.gmra.mrb[0].mxu0 %v333
    %v403 = vpop.f32.mrb[0].mxu0
    %v404 = vadd.f32 0.0, %v403
    %v405 = vpop.f32.mrb[0].mxu0
    %406 = vdwg.mxu0
    %v407 = vmul.f32 %v327, 0.17677669
    %v408 = vmul.f32 %v404, 0.17677669
    %vm409 = vcmask 64512
    %v410 = vsel %vm409, %v407, -inf
    %411 = vmax.xlane.f32.xlu0 %v410
    %v412 = vpop.xlane.xlu0 %411
    %v413 = vsel %vm409, %v408, -inf
    %414 = vmax.xlane.f32.xlu0 %v413
    %v415 = vpop.xlane.xlu0 %414
    %v416 = vsub.f32 %v407, %v412
    %v417 = vsub.f32 %v408, %v415
    %v418 = vmul.f32 %v416, 1.442695
    %v419 = vpow.pop %v418
    %v420 = vmul.f32 %v417, 1.442695
    %v421 = vpow.pop %v420
    %v422 = vsel %vm409, %v419, 0.0
    %423 = vadd.xlane.f32.xlu0 %v422
    %v424 = vpop.xlane.xlu0 %423
    %v425 = vsel %vm409, %v421, 0.0
    %426 = vadd.xlane.f32.xlu0 %v425
    %v427 = vpop.xlane.xlu0 %426
    %v428 = vrcp.pop %v424
    %v429 = vmul.f32 %v419, %v428
    %v430 = vrcp.pop %v427
    %v431 = vmul.f32 %v421, %v430
    %432 = vrot.lane.b32.xlu0 %v245, 64
    %v433 = vpop.permute.xlu0 %432
    %v436 = vsel %vm409, %v429, 0
    %438 = vmatprep.subr.mxu0 0.0
    %439 = vmatpush1.msra.mxu0 %v433
    %440 = vmatprep.subr.mxu0 0.0
    %441 = vmatpush1.msra.mxu0 0.0
    %442 = vmatprep.subr.mxu0 0.0
    %443 = vmatpush1.msra.mxu0 0.0
    %444 = vmatprep.subr.mxu0 0.0
    %445 = vmatpush1.msra.mxu0 0.0
    %446 = vmatprep.subr.mxu0 0.0
    %447 = vmatpush1.msra.mxu0 0.0
    %448 = vmatprep.subr.mxu0 0.0
    %449 = vmatpush1.msra.mxu0 0.0
    %450 = vmatprep.subr.mxu0 0.0
    %451 = vmatpush1.msra.mxu0 0.0
    %452 = vmatprep.subr.mxu0 0.0
    %453 = vmatpush1.msra.mxu0 0.0
    %454 = vmatprep.subr.mxu0 0.0
    %455 = vmatpush1.msra.mxu0 0.0
    %456 = vmatprep.subr.mxu0 0.0
    %457 = vmatpush1.msra.mxu0 0.0
    %458 = vmatprep.subr.mxu0 0.0
    %459 = vmatpush1.msra.mxu0 0.0
    %460 = vmatprep.subr.mxu0 0.0
    %461 = vmatpush1.msra.mxu0 0.0
    %462 = vmatprep.subr.mxu0 0.0
    %463 = vmatpush1.msra.mxu0 0.0
    %464 = vmatprep.subr.mxu0 0.0
    %465 = vmatpush1.msra.mxu0 0.0
    %466 = vmatprep.subr.mxu0 0.0
    %467 = vmatpush1.msra.mxu0 0.0
    %468 = vmatprep.subr.mxu0 0.0
    %469 = vmatpush1.msra.mxu0 0.0
    %470 = vmatprep.subr.mxu0 0.0
    %471 = vmatpush1.msra.mxu0 0.0
    %472 = vmatprep.subr.mxu0 0.0
    %473 = vmatpush1.msra.mxu0 0.0
    %474 = vmatprep.subr.mxu0 0.0
    %475 = vmatpush1.msra.mxu0 0.0
    %476 = vmatprep.subr.mxu0 0.0
    %477 = vmatpush1.msra.mxu0 0.0
    %478 = vmatprep.subr.mxu0 0.0
    %479 = vmatpush1.msra.mxu0 0.0
    %480 = vmatprep.subr.mxu0 0.0
    %481 = vmatpush1.msra.mxu0 0.0
    %482 = vmatprep.subr.mxu0 0.0
    %483 = vmatpush1.msra.mxu0 0.0
    %484 = vmatprep.subr.mxu0 0.0
    %485 = vmatpush1.msra.mxu0 0.0
    %486 = vmatprep.subr.mxu0 0.0
    %487 = vmatpush1.msra.mxu0 0.0
    %488 = vmatprep.subr.mxu0 0.0
    %489 = vmatpush1.msra.mxu0 0.0
    %490 = vmatprep.subr.mxu0 0.0
    %491 = vmatpush1.msra.mxu0 0.0
    %492 = vmatprep.subr.mxu0 0.0
    %493 = vmatpush1.msra.mxu0 0.0
    %494 = vmatprep.subr.mxu0 0.0
    %495 = vmatpush1.msra.mxu0 0.0
    %496 = vmatprep.subr.mxu0 0.0
    %497 = vmatpush1.msra.mxu0 0.0
    %498 = vmatprep.subr.mxu0 0.0
    %499 = vmatpush1.msra.mxu0 0.0
    %500 = vmatprep.subr.mxu0 0.0
    %501 = vmatpush1.msra.mxu0 0.0
    %502 = vmatprep.mubr.f32.mxu0 0.0
    %503 = vmatmul.mubr.f32.gmra.mrb[0].mxu0 %v436
    %v504 = vpop.f32.mrb[0].mxu0
    %v505 = vadd.f32 0.0, %v504
    %v506 = vpop.f32.mrb[0].mxu0
    %507 = vdwg.mxu0
    %508 = vrot.lane.b32.xlu0 %v250, 64
    %v509 = vpop.permute.xlu0 %508
    %v512 = vsel %vm409, %v431, 0
    %514 = vmatprep.subr.mxu0 0.0
    %515 = vmatpush1.msra.mxu0 %v509
    %516 = vmatprep.subr.mxu0 0.0
    %517 = vmatpush1.msra.mxu0 0.0
    %518 = vmatprep.subr.mxu0 0.0
    %519 = vmatpush1.msra.mxu0 0.0
    %520 = vmatprep.subr.mxu0 0.0
    %521 = vmatpush1.msra.mxu0 0.0
    %522 = vmatprep.subr.mxu0 0.0
    %523 = vmatpush1.msra.mxu0 0.0
    %524 = vmatprep.subr.mxu0 0.0
    %525 = vmatpush1.msra.mxu0 0.0
    %526 = vmatprep.subr.mxu0 0.0
    %527 = vmatpush1.msra.mxu0 0.0
    %528 = vmatprep.subr.mxu0 0.0
    %529 = vmatpush1.msra.mxu0 0.0
    %530 = vmatprep.subr.mxu0 0.0
    %531 = vmatpush1.msra.mxu0 0.0
    %532 = vmatprep.subr.mxu0 0.0
    %533 = vmatpush1.msra.mxu0 0.0
    %534 = vmatprep.subr.mxu0 0.0
    %535 = vmatpush1.msra.mxu0 0.0
    %536 = vmatprep.subr.mxu0 0.0
    %537 = vmatpush1.msra.mxu0 0.0
    %538 = vmatprep.subr.mxu0 0.0
    %539 = vmatpush1.msra.mxu0 0.0
    %540 = vmatprep.subr.mxu0 0.0
    %541 = vmatpush1.msra.mxu0 0.0
    %542 = vmatprep.subr.mxu0 0.0
    %543 = vmatpush1.msra.mxu0 0.0
    %544 = vmatprep.subr.mxu0 0.0
    %545 = vmatpush1.msra.mxu0 0.0
    %546 = vmatprep.subr.mxu0 0.0
    %547 = vmatpush1.msra.mxu0 0.0
    %548 = vmatprep.subr.mxu0 0.0
    %549 = vmatpush1.msra.mxu0 0.0
    %550 = vmatprep.subr.mxu0 0.0
    %551 = vmatpush1.msra.mxu0 0.0
    %552 = vmatprep.subr.mxu0 0.0
    %553 = vmatpush1.msra.mxu0 0.0
    %554 = vmatprep.subr.mxu0 0.0
    %555 = vmatpush1.msra.mxu0 0.0
    %556 = vmatprep.subr.mxu0 0.0
    %557 = vmatpush1.msra.mxu0 0.0
    %558 = vmatprep.subr.mxu0 0.0
    %559 = vmatpush1.msra.mxu0 0.0
    %560 = vmatprep.subr.mxu0 0.0
    %561 = vmatpush1.msra.mxu0 0.0
    %562 = vmatprep.subr.mxu0 0.0
    %563 = vmatpush1.msra.mxu0 0.0
    %564 = vmatprep.subr.mxu0 0.0
    %565 = vmatpush1.msra.mxu0 0.0
    %566 = vmatprep.subr.mxu0 0.0
    %567 = vmatpush1.msra.mxu0 0.0
    %568 = vmatprep.subr.mxu0 0.0
    %569 = vmatpush1.msra.mxu0 0.0
    %570 = vmatprep.subr.mxu0 0.0
    %571 = vmatpush1.msra.mxu0 0.0
    %572 = vmatprep.subr.mxu0 0.0
    %573 = vmatpush1.msra.mxu0 0.0
    %574 = vmatprep.subr.mxu0 0.0
    %575 = vmatpush1.msra.mxu0 0.0
    %576 = vmatprep.subr.mxu0 0.0
    %577 = vmatpush1.msra.mxu0 0.0
    %578 = vmatprep.mubr.f32.mxu0 0.0
    %579 = vmatmul.mubr.f32.gmra.mrb[0].mxu0 %v512
    %v580 = vpop.f32.mrb[0].mxu0
    %v581 = vadd.f32 0.0, %v580
    %v582 = vpop.f32.mrb[0].mxu0
    %583 = vdwg.mxu0
    %v584 = vld [vmem:[%s4] sm:$0xff]
    %v585 = vld [vmem:[%s4 + $0x8] sm:$0xff]
    %v586 = vld [vmem:[%s4 + $0x10] sm:$0xff]
    %v587 = vld [vmem:[%s4 + $0x18] sm:$0xff]
    %v588 = vld [vmem:[%s5] sm:$0x1]
    %v590 = vlaneseq
    %v591 = vshrl.u32 %v590, 7
    %v592 = vsub.s32 0, %v591
    %v593 = vrot.slane %v588, %v592
    %v596 = vsel %vm171, %v505, 0
    %v599 = vsel %vm171, %v581, 0
    %601 = vmatprep.subr.mxu0 0.0
    %602 = vmatpush1.msra.mxu0 %v584
    %603 = vmatprep.subr.mxu0 0.0
    %604 = vmatpush1.msra.mxu0 %v585
    %605 = vmatprep.subr.mxu0 0.0
    %606 = vmatpush1.msra.mxu0 %v586
    %607 = vmatprep.subr.mxu0 0.0
    %608 = vmatpush1.msra.mxu0 %v587
    %609 = vmatprep.subr.mxu0 0.0
    %610 = vmatpush1.msra.mxu0 0.0
    %611 = vmatprep.subr.mxu0 0.0
    %612 = vmatpush1.msra.mxu0 0.0
    %613 = vmatprep.subr.mxu0 0.0
    %614 = vmatpush1.msra.mxu0 0.0
    %615 = vmatprep.subr.mxu0 0.0
    %616 = vmatpush1.msra.mxu0 0.0
    %617 = vmatprep.subr.mxu0 0.0
    %618 = vmatpush1.msra.mxu0 0.0
    %619 = vmatprep.subr.mxu0 0.0
    %620 = vmatpush1.msra.mxu0 0.0
    %621 = vmatprep.subr.mxu0 0.0
    %622 = vmatpush1.msra.mxu0 0.0
    %623 = vmatprep.subr.mxu0 0.0
    %624 = vmatpush1.msra.mxu0 0.0
    %625 = vmatprep.subr.mxu0 0.0
    %626 = vmatpush1.msra.mxu0 0.0
    %627 = vmatprep.subr.mxu0 0.0
    %628 = vmatpush1.msra.mxu0 0.0
    %629 = vmatprep.subr.mxu0 0.0
    %630 = vmatpush1.msra.mxu0 0.0
    %631 = vmatprep.subr.mxu0 0.0
    %632 = vmatpush1.msra.mxu0 0.0
    %633 = vmatprep.subr.mxu0 0.0
    %634 = vmatpush1.msra.mxu0 0.0
    %635 = vmatprep.subr.mxu0 0.0
    %636 = vmatpush1.msra.mxu0 0.0
    %637 = vmatprep.subr.mxu0 0.0
    %638 = vmatpush1.msra.mxu0 0.0
    %639 = vmatprep.subr.mxu0 0.0
    %640 = vmatpush1.msra.mxu0 0.0
    %641 = vmatprep.subr.mxu0 0.0
    %642 = vmatpush1.msra.mxu0 0.0
    %643 = vmatprep.subr.mxu0 0.0
    %644 = vmatpush1.msra.mxu0 0.0
    %645 = vmatprep.subr.mxu0 0.0
    %646 = vmatpush1.msra.mxu0 0.0
    %647 = vmatprep.subr.mxu0 0.0
    %648 = vmatpush1.msra.mxu0 0.0
    %649 = vmatprep.subr.mxu0 0.0
    %650 = vmatpush1.msra.mxu0 0.0
    %651 = vmatprep.subr.mxu0 0.0
    %652 = vmatpush1.msra.mxu0 0.0
    %653 = vmatprep.subr.mxu0 0.0
    %654 = vmatpush1.msra.mxu0 0.0
    %655 = vmatprep.subr.mxu0 0.0
    %656 = vmatpush1.msra.mxu0 0.0
    %657 = vmatprep.subr.mxu0 0.0
    %658 = vmatpush1.msra.mxu0 0.0
    %659 = vmatprep.subr.mxu0 0.0
    %660 = vmatpush1.msra.mxu0 0.0
    %661 = vmatprep.subr.mxu0 0.0
    %662 = vmatpush1.msra.mxu0 0.0
    %663 = vmatprep.subr.mxu0 0.0
    %664 = vmatpush1.msra.mxu0 0.0
    %665 = vmatprep.mubr.f32.mxu0 0.0
    %666 = vmatmul.mubr.f32.gmra.mrb[0].mxu0 %v596
    %v667 = vpop.f32.mrb[0].mxu0
    %v668 = vadd.f32 %v593, %v667
    %v669 = vpop.f32.mrb[0].mxu0
    %670 = vmatprep.mubr.f32.mxu0 0.0
    %671 = vmatmul.mubr.f32.gmra.mrb[0].mxu0 %v599
    %v672 = vpop.f32.mrb[0].mxu0
    %v673 = vadd.f32 %v593, %v672
    %v674 = vpop.f32.mrb[0].mxu0
    %675 = vdwg.mxu0
    %v676 = vadd.f32 %v152, %v668
    %v677 = vadd.f32 %v157, %v673
    %v678 = vld [vmem:[%s6] sm:$0x1]
    %v679 = vld [vmem:[%s7] sm:$0x1]
    %v680 = vsel %vm171, %v676, 0.0
    %681 = vadd.xlane.f32.xlu0 %v680
    %v682 = vpop.xlane.xlu0 %681
    %v683 = vsel %vm171, %v677, 0.0
    %684 = vadd.xlane.f32.xlu0 %v683
    %v685 = vpop.xlane.xlu0 %684
    %v686 = vrcp.pop 32.0
    %v687 = vmul.f32 %v682, %v686
    %v688 = vmul.f32 %v685, %v686
    %v689 = vsub.f32 %v676, %v687
    %v690 = vsub.f32 %v677, %v688
    %v691 = vmul.f32 %v689, %v689
    %v692 = vmul.f32 %v690, %v690
    %v693 = vsel %vm171, %v691, 0.0
    %694 = vadd.xlane.f32.xlu0 %v693
    %v695 = vpop.xlane.xlu0 %694
    %v696 = vsel %vm171, %v692, 0.0
    %697 = vadd.xlane.f32.xlu0 %v696
    %v698 = vpop.xlane.xlu0 %697
    %v699 = vmul.f32 %v695, %v686
    %v700 = vmul.f32 %v698, %v686
    %v701 = vadd.f32 %v699, 1e-12
    %v702 = vadd.f32 %v700, 1e-12
    %v703 = vrsqrt.pop %v701
    %v704 = vrsqrt.pop %v702
    %v705 = vmul.f32 %v689, %v703
    %v706 = vmul.f32 %v690, %v704
    %v708 = vlaneseq
    %v709 = vshrl.u32 %v708, 7
    %v710 = vsub.s32 0, %v709
    %v711 = vrot.slane %v678, %v710
    %v713 = vmul.f32 %v705, %v711
    %v714 = vmul.f32 %v706, %v711
    %v716 = vlaneseq
    %v717 = vshrl.u32 %v716, 7
    %v718 = vsub.s32 0, %v717
    %v719 = vrot.slane %v679, %v718
    %v721 = vadd.f32 %v713, %v719
    %v722 = vadd.f32 %v714, %v719
    %v723 = vld [vmem:[%s8] sm:$0xff]
    %v724 = vld [vmem:[%s8 + $0x8] sm:$0xff]
    %v725 = vld [vmem:[%s8 + $0x10] sm:$0xff]
    %v726 = vld [vmem:[%s8 + $0x18] sm:$0xff]
    %v727 = vld [vmem:[%s9] sm:$0x1]
    %v729 = vlaneseq
    %v730 = vshrl.u32 %v729, 7
    %v731 = vsub.s32 0, %v730
    %v732 = vrot.slane %v727, %v731
    %v735 = vsel %vm171, %v721, 0
    %v738 = vsel %vm171, %v722, 0
    %740 = vmatprep.subr.mxu0 0.0
    %741 = vmatpush1.msra.mxu0 %v723
    %742 = vmatprep.subr.mxu0 0.0
    %743 = vmatpush1.msra.mxu0 %v724
    %744 = vmatprep.subr.mxu0 0.0
    %745 = vmatpush1.msra.mxu0 %v725
    %746 = vmatprep.subr.mxu0 0.0
    %747 = vmatpush1.msra.mxu0 %v726
    %748 = vmatprep.subr.mxu0 0.0
    %749 = vmatpush1.msra.mxu0 0.0
    %750 = vmatprep.subr.mxu0 0.0
    %751 = vmatpush1.msra.mxu0 0.0
    %752 = vmatprep.subr.mxu0 0.0
    %753 = vmatpush1.msra.mxu0 0.0
    %754 = vmatprep.subr.mxu0 0.0
    %755 = vmatpush1.msra.mxu0 0.0
    %756 = vmatprep.subr.mxu0 0.0
    %757 = vmatpush1.msra.mxu0 0.0
    %758 = vmatprep.subr.mxu0 0.0
    %759 = vmatpush1.msra.mxu0 0.0
    %760 = vmatprep.subr.mxu0 0.0
    %761 = vmatpush1.msra.mxu0 0.0
    %762 = vmatprep.subr.mxu0 0.0
    %763 = vmatpush1.msra.mxu0 0.0
    %764 = vmatprep.subr.mxu0 0.0
    %765 = vmatpush1.msra.mxu0 0.0
    %766 = vmatprep.subr.mxu0 0.0
    %767 = vmatpush1.msra.mxu0 0.0
    %768 = vmatprep.subr.mxu0 0.0
    %769 = vmatpush1.msra.mxu0 0.0
    %770 = vmatprep.subr.mxu0 0.0
    %771 = vmatpush1.msra.mxu0 0.0
    %772 = vmatprep.subr.mxu0 0.0
    %773 = vmatpush1.msra.mxu0 0.0
    %774 = vmatprep.subr.mxu0 0.0
    %775 = vmatpush1.msra.mxu0 0.0
    %776 = vmatprep.subr.mxu0 0.0
    %777 = vmatpush1.msra.mxu0 0.0
    %778 = vmatprep.subr.mxu0 0.0
    %779 = vmatpush1.msra.mxu0 0.0
    %780 = vmatprep.subr.mxu0 0.0
    %781 = vmatpush1.msra.mxu0 0.0
    %782 = vmatprep.subr.mxu0 0.0
    %783 = vmatpush1.msra.mxu0 0.0
    %784 = vmatprep.subr.mxu0 0.0
    %785 = vmatpush1.msra.mxu0 0.0
    %786 = vmatprep.subr.mxu0 0.0
    %787 = vmatpush1.msra.mxu0 0.0
    %788 = vmatprep.subr.mxu0 0.0
    %789 = vmatpush1.msra.mxu0 0.0
    %790 = vmatprep.subr.mxu0 0.0
    %791 = vmatpush1.msra.mxu0 0.0
    %792 = vmatprep.subr.mxu0 0.0
    %793 = vmatpush1.msra.mxu0 0.0
    %794 = vmatprep.subr.mxu0 0.0
    %795 = vmatpush1.msra.mxu0 0.0
    %796 = vmatprep.subr.mxu0 0.0
    %797 = vmatpush1.msra.mxu0 0.0
    %798 = vmatprep.subr.mxu0 0.0
    %799 = vmatpush1.msra.mxu0 0.0
    %800 = vmatprep.subr.mxu0 0.0
    %801 = vmatpush1.msra.mxu0 0.0
    %802 = vmatprep.subr.mxu0 0.0
    %803 = vmatpush1.msra.mxu0 0.0
    %804 = vmatprep.mubr.f32.mxu0 0.0
    %805 = vmatmul.mubr.f32.gmra.mrb[0].mxu0 %v735
    %v806 = vpop.f32.mrb[0].mxu0
    %v807 = vadd.f32 %v732, %v806
    %v808 = vpop.f32.mrb[0].mxu0
    %809 = vmatprep.mubr.f32.mxu0 0.0
    %810 = vmatmul.mubr.f32.gmra.mrb[0].mxu0 %v738
    %v811 = vpop.f32.mrb[0].mxu0
    %v812 = vadd.f32 %v732, %v811
    %v813 = vpop.f32.mrb[0].mxu0
    %814 = vdwg.mxu0
    %v815 = vmul.f32 %v807, 0.5
    %v816 = vmul.f32 %v812, 0.5
    %v817 = vmul.f32 %v807, 0.70710677
    %v818 = vmul.f32 %v812, 0.70710677
    %v819 = verf.f32.pop %v817
    %v820 = verf.f32.pop %v818
    %v821 = vadd.f32 %v819, 1.0
    %v822 = vadd.f32 %v820, 1.0
    %v823 = vmul.f32 %v815, %v821
    %v824 = vmul.f32 %v816, %v822
    %v825 = vld [vmem:[%s10] sm:$0xff]
    %v826 = vld [vmem:[%s10 + $0x8] sm:$0xff]
    %v827 = vld [vmem:[%s10 + $0x10] sm:$0xff]
    %v828 = vld [vmem:[%s10 + $0x18] sm:$0xff]
    %v829 = vld [vmem:[%s10 + $0x20] sm:$0xff]
    %v830 = vld [vmem:[%s10 + $0x28] sm:$0xff]
    %v831 = vld [vmem:[%s10 + $0x30] sm:$0xff]
    %v832 = vld [vmem:[%s10 + $0x38] sm:$0xff]
    %v833 = vld [vmem:[%s10 + $0x40] sm:$0xff]
    %v834 = vld [vmem:[%s10 + $0x48] sm:$0xff]
    %v835 = vld [vmem:[%s10 + $0x50] sm:$0xff]
    %v836 = vld [vmem:[%s10 + $0x58] sm:$0xff]
    %v837 = vld [vmem:[%s10 + $0x60] sm:$0xff]
    %v838 = vld [vmem:[%s10 + $0x68] sm:$0xff]
    %v839 = vld [vmem:[%s10 + $0x70] sm:$0xff]
    %v840 = vld [vmem:[%s10 + $0x78] sm:$0xff]
    %v841 = vld [vmem:[%s11] sm:$0x1]
    %v843 = vlaneseq
    %v844 = vshrl.u32 %v843, 7
    %v845 = vsub.s32 0, %v844
    %v846 = vrot.slane %v841, %v845
    %848 = vmatprep.subr.mxu0 0.0
    %849 = vmatpush1.msra.mxu0 %v825
    %850 = vmatprep.subr.mxu0 0.0
    %851 = vmatpush1.msra.mxu0 %v826
    %852 = vmatprep.subr.mxu0 0.0
    %853 = vmatpush1.msra.mxu0 %v827
    %854 = vmatprep.subr.mxu0 0.0
    %855 = vmatpush1.msra.mxu0 %v828
    %856 = vmatprep.subr.mxu0 0.0
    %857 = vmatpush1.msra.mxu0 %v829
    %858 = vmatprep.subr.mxu0 0.0
    %859 = vmatpush1.msra.mxu0 %v830
    %860 = vmatprep.subr.mxu0 0.0
    %861 = vmatpush1.msra.mxu0 %v831
    %862 = vmatprep.subr.mxu0 0.0
    %863 = vmatpush1.msra.mxu0 %v832
    %864 = vmatprep.subr.mxu0 0.0
    %865 = vmatpush1.msra.mxu0 %v833
    %866 = vmatprep.subr.mxu0 0.0
    %867 = vmatpush1.msra.mxu0 %v834
    %868 = vmatprep.subr.mxu0 0.0
    %869 = vmatpush1.msra.mxu0 %v835
    %870 = vmatprep.subr.mxu0 0.0
    %871 = vmatpush1.msra.mxu0 %v836
    %872 = vmatprep.subr.mxu0 0.0
    %873 = vmatpush1.msra.mxu0 %v837
    %874 = vmatprep.subr.mxu0 0.0
    %875 = vmatpush1.msra.mxu0 %v838
    %876 = vmatprep.subr.mxu0 0.0
    %877 = vmatpush1.msra.mxu0 %v839
    %878 = vmatprep.subr.mxu0 0.0
    %879 = vmatpush1.msra.mxu0 %v840
    %880 = vmatprep.subr.mxu0 0.0
    %881 = vmatpush1.msra.mxu0 0.0
    %882 = vmatprep.subr.mxu0 0.0
    %883 = vmatpush1.msra.mxu0 0.0
    %884 = vmatprep.subr.mxu0 0.0
    %885 = vmatpush1.msra.mxu0 0.0
    %886 = vmatprep.subr.mxu0 0.0
    %887 = vmatpush1.msra.mxu0 0.0
    %888 = vmatprep.subr.mxu0 0.0
    %889 = vmatpush1.msra.mxu0 0.0
    %890 = vmatprep.subr.mxu0 0.0
    %891 = vmatpush1.msra.mxu0 0.0
    %892 = vmatprep.subr.mxu0 0.0
    %893 = vmatpush1.msra.mxu0 0.0
    %894 = vmatprep.subr.mxu0 0.0
    %895 = vmatpush1.msra.mxu0 0.0
    %896 = vmatprep.subr.mxu0 0.0
    %897 = vmatpush1.msra.mxu0 0.0
    %898 = vmatprep.subr.mxu0 0.0
    %899 = vmatpush1.msra.mxu0 0.0
    %900 = vmatprep.subr.mxu0 0.0
    %901 = vmatpush1.msra.mxu0 0.0
    %902 = vmatprep.subr.mxu0 0.0
    %903 = vmatpush1.msra.mxu0 0.0
    %904 = vmatprep.subr.mxu0 0.0
    %905 = vmatpush1.msra.mxu0 0.0
    %906 = vmatprep.subr.mxu0 0.0
    %907 = vmatpush1.msra.mxu0 0.0
    %908 = vmatprep.subr.mxu0 0.0
    %909 = vmatpush1.msra.mxu0 0.0
    %910 = vmatprep.subr.mxu0 0.0
    %911 = vmatpush1.msra.mxu0 0.0
    %912 = vmatprep.mubr.f32.mxu0 0.0
    %913 = vmatmul.mubr.f32.gmra.mrb[0].mxu0 %v823
    %v914 = vpop.f32.mrb[0].mxu0
    %v915 = vadd.f32 %v846, %v914
    %v916 = vpop.f32.mrb[0].mxu0
    %917 = vmatprep.mubr.f32.mxu0 0.0
    %918 = vmatmul.mubr.f32.gmra.mrb[0].mxu0 %v824
    %v919 = vpop.f32.mrb[0].mxu0
    %v920 = vadd.f32 %v846, %v919
    %v921 = vpop.f32.mrb[0].mxu0
    %922 = vdwg.mxu0
    %v923 = vadd.f32 %v721, %v915
    %v924 = vadd.f32 %v722, %v920
    %v925 = vld [vmem:[%s12] sm:$0x1]
    %v926 = vld [vmem:[%s13] sm:$0x1]
    %v927 = vsel %vm171, %v923, 0.0
    %928 = vadd.xlane.f32.xlu0 %v927
    %v929 = vpop.xlane.xlu0 %928
    %v930 = vsel %vm171, %v924, 0.0
    %931 = vadd.xlane.f32.xlu0 %v930
    %v932 = vpop.xlane.xlu0 %931
    %v933 = vmul.f32 %v929, %v686
    %v934 = vmul.f32 %v932, %v686
    %v935 = vsub.f32 %v923, %v933
    %v936 = vsub.f32 %v924, %v934
    %v937 = vmul.f32 %v935, %v935
    %v938 = vmul.f32 %v936, %v936
    %v939 = vsel %vm171, %v937, 0.0
    %940 = vadd.xlane.f32.xlu0 %v939
    %v941 = vpop.xlane.xlu0 %940
    %v942 = vsel %vm171, %v938, 0.0
    %943 = vadd.xlane.f32.xlu0 %v942
    %v944 = vpop.xlane.xlu0 %943
    %v945 = vmul.f32 %v941, %v686
    %v946 = vmul.f32 %v944, %v686
    %v947 = vadd.f32 %v945, 1e-12
    %v948 = vadd.f32 %v946, 1e-12
    %v949 = vrsqrt.pop %v947
    %v950 = vrsqrt.pop %v948
    %v951 = vmul.f32 %v935, %v949
    %v952 = vmul.f32 %v936, %v950
    %v954 = vlaneseq
    %v955 = vshrl.u32 %v954, 7
    %v956 = vsub.s32 0, %v955
    %v957 = vrot.slane %v925, %v956
    %v959 = vmul.f32 %v951, %v957
    %v960 = vmul.f32 %v952, %v957
    %v962 = vlaneseq
    %v963 = vshrl.u32 %v962, 7
    %v964 = vsub.s32 0, %v963
    %v965 = vrot.slane %v926, %v964
    %v967 = vadd.f32 %v959, %v965
    %v968 = vadd.f32 %v960, %v965
    %v969 = vmul.f32 %v967, 0.5
    %v970 = vmul.f32 %v968, 0.5
    %v971 = vmul.f32 %v967, 0.70710677
    %v972 = vmul.f32 %v968, 0.70710677
    %v973 = verf.f32.pop %v971
    %v974 = verf.f32.pop %v972
    %v975 = vadd.f32 %v973, 1.0
    %v976 = vadd.f32 %v974, 1.0
    %v977 = vmul.f32 %v969, %v975
    %v978 = vmul.f32 %v970, %v976
    %v979 = vld [vmem:[%s14] sm:$0xff]
    %v980 = vld [vmem:[%s14 + $0x8] sm:$0xff]
    %v981 = vld [vmem:[%s14 + $0x10] sm:$0xff]
    %v982 = vld [vmem:[%s14 + $0x18] sm:$0xff]
    %v983 = vld [vmem:[%s15] sm:$0x1]
    %v985 = vlaneseq
    %v986 = vshrl.u32 %v985, 7
    %v987 = vsub.s32 0, %v986
    %v988 = vrot.slane %v983, %v987
    %v991 = vsel %vm171, %v977, 0
    %v994 = vsel %vm171, %v978, 0
    %996 = vmatprep.subr.mxu0 0.0
    %997 = vmatpush1.msra.mxu0 %v979
    %998 = vmatprep.subr.mxu0 0.0
    %999 = vmatpush1.msra.mxu0 %v980
    %1000 = vmatprep.subr.mxu0 0.0
    %1001 = vmatpush1.msra.mxu0 %v981
    %1002 = vmatprep.subr.mxu0 0.0
    %1003 = vmatpush1.msra.mxu0 %v982
    %1004 = vmatprep.subr.mxu0 0.0
    %1005 = vmatpush1.msra.mxu0 0.0
    %1006 = vmatprep.subr.mxu0 0.0
    %1007 = vmatpush1.msra.mxu0 0.0
    %1008 = vmatprep.subr.mxu0 0.0
    %1009 = vmatpush1.msra.mxu0 0.0
    %1010 = vmatprep.subr.mxu0 0.0
    %1011 = vmatpush1.msra.mxu0 0.0
    %1012 = vmatprep.subr.mxu0 0.0
    %1013 = vmatpush1.msra.mxu0 0.0
    %1014 = vmatprep.subr.mxu0 0.0
    %1015 = vmatpush1.msra.mxu0 0.0
    %1016 = vmatprep.subr.mxu0 0.0
    %1017 = vmatpush1.msra.mxu0 0.0
    %1018 = vmatprep.subr.mxu0 0.0
    %1019 = vmatpush1.msra.mxu0 0.0
    %1020 = vmatprep.subr.mxu0 0.0
    %1021 = vmatpush1.msra.mxu0 0.0
    %1022 = vmatprep.subr.mxu0 0.0
    %1023 = vmatpush1.msra.mxu0 0.0
    %1024 = vmatprep.subr.mxu0 0.0
    %1025 = vmatpush1.msra.mxu0 0.0
    %1026 = vmatprep.subr.mxu0 0.0
    %1027 = vmatpush1.msra.mxu0 0.0
    %1028 = vmatprep.subr.mxu0 0.0
    %1029 = vmatpush1.msra.mxu0 0.0
    %1030 = vmatprep.subr.mxu0 0.0
    %1031 = vmatpush1.msra.mxu0 0.0
    %1032 = vmatprep.subr.mxu0 0.0
    %1033 = vmatpush1.msra.mxu0 0.0
    %1034 = vmatprep.subr.mxu0 0.0
    %1035 = vmatpush1.msra.mxu0 0.0
    %1036 = vmatprep.subr.mxu0 0.0
    %1037 = vmatpush1.msra.mxu0 0.0
    %1038 = vmatprep.subr.mxu0 0.0
    %1039 = vmatpush1.msra.mxu0 0.0
    %1040 = vmatprep.subr.mxu0 0.0
    %1041 = vmatpush1.msra.mxu0 0.0
    %1042 = vmatprep.subr.mxu0 0.0
    %1043 = vmatpush1.msra.mxu0 0.0
    %1044 = vmatprep.subr.mxu0 0.0
    %1045 = vmatpush1.msra.mxu0 0.0
    %1046 = vmatprep.subr.mxu0 0.0
    %1047 = vmatpush1.msra.mxu0 0.0
    %1048 = vmatprep.subr.mxu0 0.0
    %1049 = vmatpush1.msra.mxu0 0.0
    %1050 = vmatprep.subr.mxu0 0.0
    %1051 = vmatpush1.msra.mxu0 0.0
    %1052 = vmatprep.subr.mxu0 0.0
    %1053 = vmatpush1.msra.mxu0 0.0
    %1054 = vmatprep.subr.mxu0 0.0
    %1055 = vmatpush1.msra.mxu0 0.0
    %1056 = vmatprep.subr.mxu0 0.0
    %1057 = vmatpush1.msra.mxu0 0.0
    %1058 = vmatprep.subr.mxu0 0.0
    %1059 = vmatpush1.msra.mxu0 0.0
    %1060 = vmatprep.mubr.f32.mxu0 0.0
    %1061 = vmatmul.mubr.f32.gmra.mrb[0].mxu0 %v991
    %v1062 = vpop.f32.mrb[0].mxu0
    %v1063 = vadd.f32 %v988, %v1062
    %v1064 = vpop.f32.mrb[0].mxu0
    %1065 = vmatprep.mubr.f32.mxu0 0.0
    %1066 = vmatmul.mubr.f32.gmra.mrb[0].mxu0 %v994
    %v1067 = vpop.f32.mrb[0].mxu0
    %v1068 = vadd.f32 %v988, %v1067
    %v1069 = vpop.f32.mrb[0].mxu0
    %1070 = vdwg.mxu0
    %1071 = vst [vmem:[#allocation2] sm:$0xff] %v1063
    %1072 = vst [vmem:[#allocation2 + $0x8] sm:$0xff] %v1068
    // Predicated region
    $region66: #{tpu_custom_call.1} parent=1 // pred_check
      _
    $region67: #{tpu_custom_call.1} parent=1 // pred_check_branch
      %1074 = sbr.rel (0) target = $region69
    $region68: #{tpu_custom_call.1} parent=1 // pred_region
      %s1076 = ssub.s32 256, 256
      %1077 = vsyncadd [#allocation3], %s1076
      %s1078 = sshll.u32 [#allocation2], 4
      %s1079 = int_to_ptr.vmem [resolvable:$true] %s1078
      %1084 = dma.vmem_to_hbm [thread:$0]  %s1079, 256, %s16, [#allocation3], 128, 128, 8
    $region69: #{tpu_custom_call.1} parent=1 // pred_fallthru
      _
    // Predicated region
    $region70: #{tpu_custom_call.1} parent=1 // pred_check
      _
    $region71: #{tpu_custom_call.1} parent=1 // pred_check_branch
      %1086 = sbr.rel (0) target = $region73
    $region72: #{tpu_custom_call.1} parent=1 // pred_region
      %1087 = dma.done [#allocation3], 256
    $region73: #{tpu_custom_call.1} parent=1 // pred_fallthru
      _
    %1088 = vsyncpa [#allocation3], 1

</llo_original>
